<compile_context>
chip_gen: v7x
topology: tpu7x:2x2x1
jax: 0.10.0
libtpu: 0.0.40
codegen_flags: <defaults>
</compile_context>

<pallas_src>
import functools

import jax
import jax.numpy as jnp
from jax.experimental import pallas as pl
from jax.experimental.pallas import tpu as pltpu

ALPHA = 1.0
BETA = 0.1

_LANE = 128
_SUB = 8
_TARGET_SDF_BLOCK_BYTES = 4 * 1024 * 1024   # ~4 MiB per SDF input block
_VMEM_LIMIT_BYTES = 48 * 1024 * 1024        # < 64 MiB physical on v7x, < 128 elsewhere


def _round_up(x, m):
    return ((x + m - 1) // m) * m


def _combined_loss_kernel(latp_ref, latt_ref, sdfp_ref, sdft_ref,   # VMEM tiles
                          out_ref,                                   # (1,8,128) f32 VMEM
                          acc_ref,                                   # (3,) f32 SMEM scratch
                          *, tb, tn, b, n, nbt, jpc):
    c = pl.program_id(0)    # sample-chunk owner ("parallel" axis -> v7x TC split)
    i = pl.program_id(1)    # batch-tile index
    jj = pl.program_id(2)   # sample tile within this chunk (innermost, streamed)

    # ---- init this core's accumulators -------------------------------------
    @pl.when((i == 0) & (jj == 0))
    def _init():
        acc_ref[0] = jnp.float32(0.0)   # sum of squared latent diffs
        acc_ref[1] = jnp.float32(0.0)   # sum of squared sdf diffs
        acc_ref[2] = jnp.float32(0.0)   # sum of per-example latent L2 norms

    # ---- SDF squared-error partial sum, ragged edges masked in-kernel ------
    # Logical (unclamped) offsets: a redundant tail tile (clamped DMA) masks to
    # all-false and contributes exactly zero.
    row_off = i * tb
    col_off = (c * jpc + jj) * tn
    row_ok = (jax.lax.broadcasted_iota(jnp.int32, (tb, 1), 0) + row_off) < b
    col_ok = (jax.lax.broadcasted_iota(jnp.int32, (1, tn), 1) + col_off) < n
    d_sdf = (sdfp_ref[...] - sdft_ref[...]).astype(jnp.float32)
    d_sdf = jnp.where(row_ok & col_ok, d_sdf, 0.0)
    acc_ref[1] += jnp.sum(d_sdf * d_sdf)

    # ---- Latent terms once per batch tile (core 0 only; rows zero-padded) --
    @pl.when((c == 0) & (jj == 0))
    def _latent():
        lp = latp_ref[...]              # (tb, dp) f32, zero-padded in the wrapper
        lt = latt_ref[...]
        d_lat = lp - lt
        acc_ref[0] += jnp.sum(d_lat * d_lat)
        sq = jnp.sum(lp * lp, axis=1, keepdims=True)     # lane/XLU reduce -> (tb, 1)
        acc_ref[2] += jnp.sum(jnp.sqrt(sq))              # sqrt on EUP; zero rows add 0

    # ---- per-core finalize: publish the three raw sums as a lane vector ----
    @pl.when((i == nbt - 1) & (jj == jpc - 1))
    def _finalize():
        lane = jax.lax.broadcasted_iota(jnp.int32, (1, _SUB, _LANE), 2)
        out_ref[...] = jnp.where(
            lane == 0, acc_ref[0],
            jnp.where(lane == 1, acc_ref[1],
                      jnp.where(lane == 2, acc_ref[2], jnp.float32(0.0))))


def combined_loss(predicted_latent, target_latent, predicted_sdf, target_sdf,
                  alpha=ALPHA, beta=BETA):
    """Returns (total_loss, dict) mirroring the PyTorch forward.

    The dict holds 0-d device arrays (no host syncs inside the wrapper, so it is
    jittable); callers that want Python floats can convert outside of jit.
    """
    alpha = float(alpha)
    beta = float(beta)

    B, D = predicted_latent.shape
    Bs, N = predicted_sdf.shape
    assert Bs == B and target_latent.shape == (B, D) and target_sdf.shape == (B, N)

    sdf_dtype = predicted_sdf.dtype
    if target_sdf.dtype != sdf_dtype:
        target_sdf = target_sdf.astype(sdf_dtype)
    itemsize = jnp.dtype(sdf_dtype).itemsize

    # ---- Batch tiling: lane/sublane-friendly when big, full-batch otherwise.
    tb = 128 if B >= 128 else B            # full-dim block is always legal
    nbt = pl.cdiv(B, tb)

    # ---- SDF tile width sized by bytes (~4 MiB/block): big DMAs, few steps.
    n_pad = _round_up(N, _LANE)
    tn = max(_LANE, (_TARGET_SDF_BLOCK_BYTES // (tb * itemsize)) // _LANE * _LANE)
    tn = min(tn, n_pad)
    nj = pl.cdiv(N, tn)
    # Prefer >= 2 sample tiles so the "parallel" axis can feed both v7x cores.
    if nj < 2 and n_pad > _LANE:
        tn = _round_up(pl.cdiv(N, 2), _LANE)
        nj = pl.cdiv(N, tn)

    nc = 2 if nj >= 2 else 1               # core-split factor (harmless on 1-TC chips)
    jpc = pl.cdiv(nj, nc)                  # sample tiles per core

    # ---- Latent: tiny, so cast to f32 and zero-pad (zeros change no sum). ---
    dp = _round_up(D, _LANE)
    bp = nbt * tb
    lat_p = jnp.pad(predicted_latent.astype(jnp.float32), ((0, bp - B), (0, dp - D)))
    lat_t = jnp.pad(target_latent.astype(jnp.float32), ((0, bp - B), (0, dp - D)))

    kernel = functools.partial(_combined_loss_kernel,
                               tb=tb, tn=tn, b=B, n=N, nbt=nbt, jpc=jpc)

    def lat_map(c, i, jj):
        return (i, 0)                      # resident across the sample tiles

    def sdf_map(c, i, jj):
        # Clamp so a redundant tail tile (odd nj) still DMAs in-range data;
        # the kernel's mask zeroes its contribution.
        return (i, jnp.minimum(c * jpc + jj, nj - 1))

    grid_spec = pltpu.PrefetchScalarGridSpec(
        num_scalar_prefetch=0,
        grid=(nc, nbt, jpc),
        in_specs=[
            pl.BlockSpec((tb, dp), lat_map),
            pl.BlockSpec((tb, dp), lat_map),
            pl.BlockSpec((tb, tn), sdf_map),       # SDF: pipelined, unpadded stream
            pl.BlockSpec((tb, tn), sdf_map),
        ],
        out_specs=pl.BlockSpec((1, _SUB, _LANE), lambda c, i, jj: (c, 0, 0)),
        scratch_shapes=[pltpu.SMEM((3,), jnp.float32)],
    )

    bytes_accessed = 2 * B * N * itemsize + 2 * bp * dp * 4 + nc * _SUB * _LANE * 4

    partials = pl.pallas_call(
        kernel,
        out_shape=jax.ShapeDtypeStruct((nc, _SUB, _LANE), jnp.float32),
        grid_spec=grid_spec,
        compiler_params=pltpu.CompilerParams(
            dimension_semantics=("parallel", "arbitrary", "arbitrary"),
            vmem_limit_bytes=_VMEM_LIMIT_BYTES),
        cost_estimate=pl.CostEstimate(
            flops=3 * B * N + 5 * B * D,
            transcendentals=B,
            bytes_accessed=bytes_accessed),
    )(lat_p, lat_t, predicted_sdf, target_sdf)

    # Cross-core combine + divides + alpha/beta mix in plain JAX (cheap, exact
    # means use the true B, D, N).
    sums = jnp.sum(partials[:, 0, :3], axis=0)
    latent_loss = sums[0] / float(B * D)
    sdf_loss = sums[1] / float(B * N)
    reg_loss = sums[2] / float(B)
    total_loss = sdf_loss + alpha * latent_loss + beta * reg_loss

    # TODO(synk): PyTorch returns Python floats via .item(); we keep device
    # scalars to stay jittable (convert outside jit if host floats are needed).
    loss_dict = {
        'total_loss': total_loss,
        'sdf_loss': sdf_loss,
        'latent_loss': latent_loss,
        'reg_loss': reg_loss,
    }
    return total_loss, loss_dict


def _reference(predicted_latent, target_latent, predicted_sdf, target_sdf,
               alpha=ALPHA, beta=BETA):
    latent_loss = jnp.mean((predicted_latent - target_latent) ** 2)
    sdf_loss = jnp.mean((predicted_sdf - target_sdf) ** 2)
    reg_loss = jnp.mean(jnp.linalg.norm(predicted_latent, axis=1))
    total = sdf_loss + alpha * latent_loss + beta * reg_loss
    return total, sdf_loss, latent_loss, reg_loss


if __name__ == "__main__":
    key = jax.random.PRNGKey(0)
    loss_fn = jax.jit(combined_loss)

    # Small test shapes: (batch, latent_dim, num_sdf_samples).  The second case
    # exercises ragged sample tiles + the two-chunk "parallel" split.
    for (B, D, N) in [(8, 32, 64), (8, 32, 200)]:
        k1, k2, k3, k4, key = jax.random.split(key, 5)
        predicted_latent = jax.random.normal(k1, (B, D), dtype=jnp.float32)
        target_latent = jax.random.normal(k2, (B, D), dtype=jnp.float32)
        predicted_sdf = jax.random.normal(k3, (B, N), dtype=jnp.float32)
        target_sdf = jax.random.normal(k4, (B, N), dtype=jnp.float32)

        total_loss, loss_dict = loss_fn(
            predicted_latent, target_latent, predicted_sdf, target_sdf)
        jax.block_until_ready(total_loss)

        ref_total, ref_sdf, ref_lat, ref_reg = _reference(
            predicted_latent, target_latent, predicted_sdf, target_sdf)
        assert abs(float(total_loss) - float(ref_total)) < 1e-5
        assert abs(float(loss_dict['sdf_loss']) - float(ref_sdf)) < 1e-5
        assert abs(float(loss_dict['latent_loss']) - float(ref_lat)) < 1e-5
        assert abs(float(loss_dict['reg_loss']) - float(ref_reg)) < 1e-5

    print("KERNEL_OK")
</pallas_src>

<mosaic_0001>
module attributes {stable_mosaic.version = 11 : i64} {
  func.func @_combined_loss_kernel(%arg0: i32, %arg1: i32, %arg2: i32, %arg3: memref<8x128xf32, #tpu.memory_space<vmem>>, %arg4: memref<8x128xf32, #tpu.memory_space<vmem>>, %arg5: memref<8x128xf32, #tpu.memory_space<vmem>>, %arg6: memref<8x128xf32, #tpu.memory_space<vmem>>, %arg7: memref<1x8x128xf32, #tpu.memory_space<vmem>>, %arg8: memref<3xf32, #tpu.memory_space<smem>>) attributes {dimension_semantics = [#tpu.dimension_semantics<parallel>, #tpu.dimension_semantics<arbitrary>, #tpu.dimension_semantics<arbitrary>], iteration_bounds = array<i64: 1, 1, 1>, scalar_prefetch = 0 : i64, scratch_operands = 1 : i64, tpu.core_type = #tpu.core_type<tc>, window_params = [{transform_indices = @transform_0, window_bounds = array<i64: 8, 128>}, {transform_indices = @transform_1, window_bounds = array<i64: 8, 128>}, {transform_indices = @transform_2, window_bounds = array<i64: 8, 128>}, {transform_indices = @transform_3, window_bounds = array<i64: 8, 128>}, {transform_indices = @transform_4, window_bounds = array<i64: 1, 8, 128>}]} {
    %c0_i32 = arith.constant 0 : i32
    %0 = arith.cmpi eq, %arg1, %c0_i32 : i32
    %c0_i32_0 = arith.constant 0 : i32
    %1 = arith.cmpi eq, %arg2, %c0_i32_0 : i32
    %2 = arith.andi %0, %1 : i1
    %3 = arith.extui %2 : i1 to i32
    %c0_i32_1 = arith.constant 0 : i32
    %4 = arith.cmpi ne, %3, %c0_i32_1 : i32
    scf.if %4 {
      %cst_14 = arith.constant 0.000000e+00 : f32
      %c0_15 = arith.constant 0 : index
      %45 = memref.load %arg8[%c0_15] : memref<3xf32, #tpu.memory_space<smem>>
      memref.store %cst_14, %arg8[%c0_15] : memref<3xf32, #tpu.memory_space<smem>>
      %cst_16 = arith.constant 0.000000e+00 : f32
      %c1_17 = arith.constant 1 : index
      %46 = memref.load %arg8[%c1_17] : memref<3xf32, #tpu.memory_space<smem>>
      memref.store %cst_16, %arg8[%c1_17] : memref<3xf32, #tpu.memory_space<smem>>
      %cst_18 = arith.constant 0.000000e+00 : f32
      %c2 = arith.constant 2 : index
      %47 = memref.load %arg8[%c2] : memref<3xf32, #tpu.memory_space<smem>>
      memref.store %cst_18, %arg8[%c2] : memref<3xf32, #tpu.memory_space<smem>>
    } else {
    }
    %c8_i32 = arith.constant 8 : i32
    %5 = arith.muli %arg1, %c8_i32 : i32
    %c1_i32 = arith.constant 1 : i32
    %6 = arith.muli %arg0, %c1_i32 : i32
    %7 = arith.addi %6, %arg2 : i32
    %c128_i32 = arith.constant 128 : i32
    %8 = arith.muli %7, %c128_i32 : i32
    %9 = tpu.iota {dimensions = array<i32: 0>} : vector<8x1xi32>
    %10 = vector.broadcast %5 : i32 to vector<8x1xi32>
    %11 = arith.addi %9, %10 : vector<8x1xi32>
    %c8_i32_2 = arith.constant 8 : i32
    %12 = vector.broadcast %c8_i32_2 : i32 to vector<8x1xi32>
    %13 = arith.cmpi slt, %11, %12 : vector<8x1xi32>
    %14 = tpu.iota {dimensions = array<i32: 1>} : vector<1x128xi32>
    %15 = vector.broadcast %8 : i32 to vector<1x128xi32>
    %16 = arith.addi %14, %15 : vector<1x128xi32>
    %c64_i32 = arith.constant 64 : i32
    %17 = vector.broadcast %c64_i32 : i32 to vector<1x128xi32>
    %18 = arith.cmpi slt, %16, %17 : vector<1x128xi32>
    %c0 = arith.constant 0 : index
    %c0_3 = arith.constant 0 : index
    %19 = vector.load %arg5[%c0, %c0_3] : memref<8x128xf32, #tpu.memory_space<vmem>>, vector<8x128xf32>
    %c0_4 = arith.constant 0 : index
    %c0_5 = arith.constant 0 : index
    %20 = vector.load %arg6[%c0_4, %c0_5] : memref<8x128xf32, #tpu.memory_space<vmem>>, vector<8x128xf32>
    %21 = arith.subf %19, %20 : vector<8x128xf32>
    %22 = vector.broadcast %13 : vector<8x1xi1> to vector<8x128xi1>
    %23 = vector.broadcast %18 : vector<1x128xi1> to vector<8x128xi1>
    %24 = arith.andi %22, %23 : vector<8x128xi1>
    %cst = arith.constant 0.000000e+00 : f32
    %25 = vector.broadcast %cst : f32 to vector<8x128xf32>
    %26 = arith.select %24, %21, %25 : vector<8x128xi1>, vector<8x128xf32>
    %c1 = arith.constant 1 : index
    %27 = memref.load %arg8[%c1] : memref<3xf32, #tpu.memory_space<smem>>
    %28 = arith.mulf %26, %26 : vector<8x128xf32>
    %29 = vector.shape_cast %28 : vector<8x128xf32> to vector<1x8x128xf32>
    %cst_6 = arith.constant dense<0.000000e+00> : vector<1xf32>
    %30 = vector.multi_reduction <add>, %29, %cst_6 [1, 2] : vector<1x8x128xf32> to vector<1xf32>
    %31 = vector.shape_cast %30 : vector<1xf32> to vector<1x1x1xf32>
    %32 = vector.extract %31[0, 0, 0] : f32 from vector<1x1x1xf32>
    %33 = arith.addf %27, %32 : f32
    %c1_7 = arith.constant 1 : index
    %34 = memref.load %arg8[%c1_7] : memref<3xf32, #tpu.memory_space<smem>>
    memref.store %33, %arg8[%c1_7] : memref<3xf32, #tpu.memory_space<smem>>
    %c0_i32_8 = arith.constant 0 : i32
    %35 = arith.cmpi eq, %arg0, %c0_i32_8 : i32
    %c0_i32_9 = arith.constant 0 : i32
    %36 = arith.cmpi eq, %arg2, %c0_i32_9 : i32
    %37 = arith.andi %35, %36 : i1
    %38 = arith.extui %37 : i1 to i32
    %c0_i32_10 = arith.constant 0 : i32
    %39 = arith.cmpi ne, %38, %c0_i32_10 : i32
    scf.if %39 {
      %c0_14 = arith.constant 0 : index
      %c0_15 = arith.constant 0 : index
      %45 = vector.load %arg3[%c0_14, %c0_15] : memref<8x128xf32, #tpu.memory_space<vmem>>, vector<8x128xf32>
      %c0_16 = arith.constant 0 : index
      %c0_17 = arith.constant 0 : index
      %46 = vector.load %arg4[%c0_16, %c0_17] : memref<8x128xf32, #tpu.memory_space<vmem>>, vector<8x128xf32>
      %47 = arith.subf %45, %46 : vector<8x128xf32>
      %c0_18 = arith.constant 0 : index
      %48 = memref.load %arg8[%c0_18] : memref<3xf32, #tpu.memory_space<smem>>
      %49 = arith.mulf %47, %47 : vector<8x128xf32>
      %50 = vector.shape_cast %49 : vector<8x128xf32> to vector<1x8x128xf32>
      %cst_19 = arith.constant dense<0.000000e+00> : vector<1xf32>
      %51 = vector.multi_reduction <add>, %50, %cst_19 [1, 2] : vector<1x8x128xf32> to vector<1xf32>
      %52 = vector.shape_cast %51 : vector<1xf32> to vector<1x1x1xf32>
      %53 = vector.extract %52[0, 0, 0] : f32 from vector<1x1x1xf32>
      %54 = arith.addf %48, %53 : f32
      %c0_20 = arith.constant 0 : index
      %55 = memref.load %arg8[%c0_20] : memref<3xf32, #tpu.memory_space<smem>>
      memref.store %54, %arg8[%c0_20] : memref<3xf32, #tpu.memory_space<smem>>
      %56 = arith.mulf %45, %45 : vector<8x128xf32>
      %cst_21 = arith.constant dense<0.000000e+00> : vector<8xf32>
      %57 = vector.multi_reduction <add>, %56, %cst_21 [1] : vector<8x128xf32> to vector<8xf32>
      %58 = vector.shape_cast %57 : vector<8xf32> to vector<8x1xf32>
      %c2 = arith.constant 2 : index
      %59 = memref.load %arg8[%c2] : memref<3xf32, #tpu.memory_space<smem>>
      %60 = math.sqrt %58 : vector<8x1xf32>
      %61 = vector.shape_cast %60 : vector<8x1xf32> to vector<1x8x1xf32>
      %cst_22 = arith.constant dense<0.000000e+00> : vector<1xf32>
      %62 = vector.multi_reduction <add>, %61, %cst_22 [1, 2] : vector<1x8x1xf32> to vector<1xf32>
      %63 = vector.shape_cast %62 : vector<1xf32> to vector<1x1x1xf32>
      %64 = vector.extract %63[0, 0, 0] : f32 from vector<1x1x1xf32>
      %65 = arith.addf %59, %64 : f32
      %c2_23 = arith.constant 2 : index
      %66 = memref.load %arg8[%c2_23] : memref<3xf32, #tpu.memory_space<smem>>
      memref.store %65, %arg8[%c2_23] : memref<3xf32, #tpu.memory_space<smem>>
    } else {
    }
    %c0_i32_11 = arith.constant 0 : i32
    %40 = arith.cmpi eq, %arg1, %c0_i32_11 : i32
    %c0_i32_12 = arith.constant 0 : i32
    %41 = arith.cmpi eq, %arg2, %c0_i32_12 : i32
    %42 = arith.andi %40, %41 : i1
    %43 = arith.extui %42 : i1 to i32
    %c0_i32_13 = arith.constant 0 : i32
    %44 = arith.cmpi ne, %43, %c0_i32_13 : i32
    scf.if %44 {
      %45 = tpu.iota {dimensions = array<i32: 2>} : vector<1x8x128xi32>
      %c0_i32_14 = arith.constant 0 : i32
      %46 = vector.broadcast %c0_i32_14 : i32 to vector<1x8x128xi32>
      %47 = arith.cmpi eq, %45, %46 : vector<1x8x128xi32>
      %c0_15 = arith.constant 0 : index
      %48 = memref.load %arg8[%c0_15] : memref<3xf32, #tpu.memory_space<smem>>
      %c1_i32_16 = arith.constant 1 : i32
      %49 = vector.broadcast %c1_i32_16 : i32 to vector<1x8x128xi32>
      %50 = arith.cmpi eq, %45, %49 : vector<1x8x128xi32>
      %c1_17 = arith.constant 1 : index
      %51 = memref.load %arg8[%c1_17] : memref<3xf32, #tpu.memory_space<smem>>
      %c2_i32 = arith.constant 2 : i32
      %52 = vector.broadcast %c2_i32 : i32 to vector<1x8x128xi32>
      %53 = arith.cmpi eq, %45, %52 : vector<1x8x128xi32>
      %c2 = arith.constant 2 : index
      %54 = memref.load %arg8[%c2] : memref<3xf32, #tpu.memory_space<smem>>
      %cst_18 = arith.constant 0.000000e+00 : f32
      %55 = vector.broadcast %54 : f32 to vector<1x8x128xf32>
      %56 = vector.broadcast %cst_18 : f32 to vector<1x8x128xf32>
      %57 = arith.select %53, %55, %56 : vector<1x8x128xi1>, vector<1x8x128xf32>
      %58 = vector.broadcast %51 : f32 to vector<1x8x128xf32>
      %59 = arith.select %50, %58, %57 : vector<1x8x128xi1>, vector<1x8x128xf32>
      %60 = vector.broadcast %48 : f32 to vector<1x8x128xf32>
      %61 = arith.select %47, %60, %59 : vector<1x8x128xi1>, vector<1x8x128xf32>
      %c0_19 = arith.constant 0 : index
      %c0_20 = arith.constant 0 : index
      %c0_21 = arith.constant 0 : index
      %62 = vector.load %arg7[%c0_19, %c0_20, %c0_21] : memref<1x8x128xf32, #tpu.memory_space<vmem>>, vector<1x8x128xf32>
      tpu.vector_store %arg7[%c0_19, %c0_20, %c0_21], %61 {strides = array<i32>} : memref<1x8x128xf32, #tpu.memory_space<vmem>>, vector<1x8x128xf32>,
    } else {
    }
    return
  }
  func.func @transform_0(%arg0: i32, %arg1: i32, %arg2: i32) -> (i32, i32) {
    %c0_i32 = arith.constant 0 : i32
    %c0_i32_0 = arith.constant 0 : i32
    return %arg1, %c0_i32 : i32, i32
  }
  func.func @transform_1(%arg0: i32, %arg1: i32, %arg2: i32) -> (i32, i32) {
    %c0_i32 = arith.constant 0 : i32
    %c0_i32_0 = arith.constant 0 : i32
    return %arg1, %c0_i32 : i32, i32
  }
  func.func @transform_2(%arg0: i32, %arg1: i32, %arg2: i32) -> (i32, i32) {
    %c1_i32 = arith.constant 1 : i32
    %0 = arith.muli %arg0, %c1_i32 : i32
    %1 = arith.addi %0, %arg2 : i32
    %c0_i32 = arith.constant 0 : i32
    %2 = arith.minsi %1, %c0_i32 : i32
    %c0_i32_0 = arith.constant 0 : i32
    return %arg1, %2 : i32, i32
  }
  func.func @transform_3(%arg0: i32, %arg1: i32, %arg2: i32) -> (i32, i32) {
    %c1_i32 = arith.constant 1 : i32
    %0 = arith.muli %arg0, %c1_i32 : i32
    %1 = arith.addi %0, %arg2 : i32
    %c0_i32 = arith.constant 0 : i32
    %2 = arith.minsi %1, %c0_i32 : i32
    %c0_i32_0 = arith.constant 0 : i32
    return %arg1, %2 : i32, i32
  }
  func.func @transform_4(%arg0: i32, %arg1: i32, %arg2: i32) -> (i32, i32, i32) {
    %c0_i32 = arith.constant 0 : i32
    %c0_i32_0 = arith.constant 0 : i32
    %c0_i32_1 = arith.constant 0 : i32
    return %arg0, %c0_i32, %c0_i32_0 : i32, i32, i32
  }
}

</mosaic_0001>

<llo_original>
// kernel: combined_loss.1
$region0: #{combined_loss.1}
  #allocation0 [shape = 'u32[]', space=smem, size = 0x4, offset = 0x4, fixed_abs, tag = 'smem constant byte address 0x4 - core index']
  #allocation1 [shape = 'u32[144,128]{1,0:T(1,128)}', space=vmem, size = 0x12000, scoped, tag = 'internal scratch']
  #allocation2 [shape = 'f32[3]{0:T(128)}', space=smem, size = 0x200, scoped, tag = 'scratch operand']
  %s0 = inlined_call_operand.vmem [shape: f32[8,128], index: 0, kind: input, shape index: {}]
  %s1 = inlined_call_operand.vmem [shape: f32[8,128], index: 1, kind: input, shape index: {}]
  %s2 = inlined_call_operand.vmem [shape: f32[8,64], index: 2, kind: input, shape index: {}]
  %s3 = inlined_call_operand.vmem [shape: f32[8,64], index: 3, kind: input, shape index: {}]
  %s4 = inlined_call_operand.vmem [shape: f32[1,8,128], index: 4, kind: output, shape index: {}]
  %s5 = sld [smem:[#allocation0]]
  $region38: #{combined_loss.1} parent=0
    _
  %s7 = ssub.s32 1, %s5
  %s8 = scalar_select 0, %s7, %s5
  // Predicated region
  $region2: #{combined_loss.1} parent=0 // pred_check
    _
  $region3: #{combined_loss.1} parent=0 // pred_check_branch
    %10 = sbr.rel (0) target = $region5
  $region4: #{combined_loss.1} parent=0 // pred_region
    _
  $region5: #{combined_loss.1} parent=0 // pred_fallthru
    _
  // Predicated region
  $region6: #{combined_loss.1} parent=0 // pred_check
    _
  $region7: #{combined_loss.1} parent=0 // pred_check_branch
    %12 = sbr.rel (0) target = $region9
  $region8: #{combined_loss.1} parent=0 // pred_region
    _
  $region9: #{combined_loss.1} parent=0 // pred_fallthru
    _
  // Predicated region
  $region10: #{combined_loss.1} parent=0 // pred_check
    _
  $region11: #{combined_loss.1} parent=0 // pred_check_branch
    %14 = sbr.rel (0) target = $region13
  $region12: #{combined_loss.1} parent=0 // pred_region
    %s15 = sadd.s32 0, 0
    %p16 = scmp.lt.s32.totalorder %s15, 0
    %s17 = scalar_select %p16, %s15, 0
    %p18 = scmp.lt.s32.totalorder %s17, 0
    %s19 = scalar_select %p18, %s17, 0
    %s20 = smul.addr %s19, 8
    %s21 = scalar_lea.vmem %s2, %s20
    %s22 = sadd.s32 0, 0
    %p23 = scmp.lt.s32.totalorder %s22, 0
    %s24 = scalar_select %p23, %s22, 0
  $region13: #{combined_loss.1} parent=0 // pred_fallthru
    _
  // Predicated region
  $region14: #{combined_loss.1} parent=0 // pred_check
    _
  $region15: #{combined_loss.1} parent=0 // pred_check_branch
    %26 = sbr.rel (0) target = $region17
  $region16: #{combined_loss.1} parent=0 // pred_region
    %s27 = sadd.s32 0, 0
    %p28 = scmp.lt.s32.totalorder %s27, 0
    %s29 = scalar_select %p28, %s27, 0
    %p30 = scmp.lt.s32.totalorder %s29, 0
    %s31 = scalar_select %p30, %s29, 0
    %s32 = smul.addr %s31, 8
    %s33 = scalar_lea.vmem %s3, %s32
    %s34 = sadd.s32 0, 0
    %p35 = scmp.lt.s32.totalorder %s34, 0
    %s36 = scalar_select %p35, %s34, 0
  $region17: #{combined_loss.1} parent=0 // pred_fallthru
    _
  %s37 = sadd.s32 0, 0
  %p38 = scmp.lt.s32.totalorder %s37, 0
  %s39 = scalar_select %p38, %s37, 0
  %p40 = scmp.lt.s32.totalorder %s39, 0
  %s41 = scalar_select %p40, %s39, 0
  %s42 = smul.addr %s41, 8
  %s43 = scalar_lea.vmem %s2, %s42
  %s44 = sadd.s32 0, 0
  %p45 = scmp.lt.s32.totalorder %s44, 0
  %s46 = scalar_select %p45, %s44, 0
  %p47 = scmp.lt.s32.totalorder %s46, 0
  %s48 = scalar_select %p47, %s46, 0
  %s49 = smul.addr %s48, 8
  %s50 = scalar_lea.vmem %s3, %s49
  %s51 = sadd.s32 0, 0
  %p52 = scmp.lt.s32.totalorder %s51, 0
  %s53 = scalar_select %p52, %s51, 0
  %p54 = scmp.lt.s32.totalorder %s53, 0
  %s55 = scalar_select %p54, %s53, 0
  %s56 = smul.addr %s55, 8
  %s57 = scalar_lea.vmem %s2, %s56
  %s58 = sadd.s32 0, 0
  %p59 = scmp.lt.s32.totalorder %s58, 0
  %s60 = scalar_select %p59, %s58, 0
  %s61 = sadd.s32 0, 0
  %p62 = scmp.lt.s32.totalorder %s61, 0
  %s63 = scalar_select %p62, %s61, 0
  %p64 = scmp.lt.s32.totalorder %s63, 0
  %s65 = scalar_select %p64, %s63, 0
  %s66 = smul.addr %s65, 8
  %s67 = scalar_lea.vmem %s3, %s66
  %s68 = sadd.s32 0, 0
  %p69 = scmp.lt.s32.totalorder %s68, 0
  %s70 = scalar_select %p69, %s68, 0
  %p71 = scmp.eq.s32.totalorder 0, 0
  %p72 = scmp.eq.s32.totalorder 0, 0
  %p73 = pnand %p71, %p72
  %p74 = pneg %p73
  // Predicated region
  $region18: #{combined_loss.1} parent=0 // pred_check
    _
  $region19: #{combined_loss.1} parent=0 // pred_check_branch
    %76 = sbr.rel (%p73) target = $region21
  $region20: #{combined_loss.1} parent=0 // pred_region
    %s77 = scalar_lea.smem [#allocation2], 0
    %78 = sst [smem:[%s77]] 0.0
    %s79 = scalar_lea.smem [#allocation2], 1
    %80 = sst [smem:[%s79]] 0.0
    %s81 = scalar_lea.smem [#allocation2], 2
    %82 = sst [smem:[%s81]] 0.0
  $region21: #{combined_loss.1} parent=0 // pred_fallthru
    _
  %s83 = smul.u32 0, 8
  %s84 = sadd.s32 0, 0
  %s85 = smul.u32 %s84, 128
  %v86 = vlaneseq
  %v87 = vshrl.u32 %v86, 7
  %v88 = vstv %s83
  %v89 = vadd.s32 %v87, %v88
  %vm90 = vcmp.lt.s32.totalorder %v89, 8
  %v91 = vlaneseq
  %v92 = vand.u32 %v91, 127
  %v93 = vstv %s85
  %v94 = vadd.s32 %v92, %v93
  %vm95 = vcmp.lt.s32.totalorder %v94, 64
  %v96 = vld [vmem:[%s57] sm:$0xff]
  %v97 = vld [vmem:[%s67] sm:$0xff]
  %v98 = vsub.f32 %v96, %v97
  %v99 = vsel %vm90, 1, 0
  %vm100 = vcmp.eq.s32.totalorder %v99, 1
  %v101 = vsel %vm95, 1, 0
  %vm102 = vcmp.eq.s32.totalorder %v101, 1
  %vm103 = vmand %vm100, %vm102
  %v104 = vsel %vm103, %v98, 0.0
  %s105 = sld [smem:[#allocation2 + $0x1]]
  %v106 = vmul.f32 %v104, %v104
  %107 = vadd.xlane.f32.xlu0 %v106
  %v108 = vpop.xlane.xlu0 %107
  %v109 = vrot.slane %v108, 4
  %v110 = vadd.f32 %v108, %v109
  %v111 = vrot.slane %v110, 2
  %v112 = vadd.f32 %v110, %v111
  %v113 = vrot.slane %v112, 1
  %v114 = vadd.f32 %v112, %v113
  %s115 = vtos %v114
  %s116 = sadd.f32 %s105, %s115
  %s117 = scalar_lea.smem [#allocation2], 1
  %118 = sst [smem:[%s117]] %s116
  %p119 = scmp.eq.s32.totalorder 0, 0
  %p120 = pnand %p119, %p72
  %p121 = pneg %p120
  // Predicated region
  $region22: #{combined_loss.1} parent=0 // pred_check
    _
  $region23: #{combined_loss.1} parent=0 // pred_check_branch
    %123 = sbr.rel (%p120) target = $region25
  $region24: #{combined_loss.1} parent=0 // pred_region
    %v124 = vld [vmem:[%s0] sm:$0xff]
    %v125 = vld [vmem:[%s1] sm:$0xff]
    %v126 = vsub.f32 %v124, %v125
    %s127 = sld [smem:[#allocation2]]
    %v128 = vmul.f32 %v126, %v126
    %129 = vadd.xlane.f32.xlu0 %v128
    %v130 = vpop.xlane.xlu0 %129
    %v131 = vrot.slane %v130, 4
    %v132 = vadd.f32 %v130, %v131
    %v133 = vrot.slane %v132, 2
    %v134 = vadd.f32 %v132, %v133
    %v135 = vrot.slane %v134, 1
    %v136 = vadd.f32 %v134, %v135
    %s137 = vtos %v136
    %s138 = sadd.f32 %s127, %s137
    %s139 = scalar_lea.smem [#allocation2], 0
    %140 = sst [smem:[%s139]] %s138
    %v141 = vmul.f32 %v124, %v124
    %142 = vadd.xlane.f32.xlu0 %v141
    %v143 = vpop.xlane.xlu0 %142
    %s144 = sld [smem:[#allocation2 + $0x2]]
    %v145 = vrsqrt.pop %v143
    %v146 = vmul.f32 %v143, %v145
    %vm147 = vcmp.eq.f32.partialorder %v143, inf
    %v148 = vsel %vm147, %v143, %v146
    %vm149 = vcmp.eq.f32.partialorder %v143, 0.0
    %v150 = vand.u32 %v143, 2147483648
    %v151 = vsel %vm149, %v150, %v148
    %vm152 = vcmask 7168
    %v153 = vsel %vm152, %v151, 0.0
    %154 = vadd.xlane.f32.xlu0 %v153
    %v155 = vpop.xlane.xlu0 %154
    %v156 = vrot.slane %v155, 4
    %v157 = vadd.f32 %v155, %v156
    %v158 = vrot.slane %v157, 2
    %v159 = vadd.f32 %v157, %v158
    %v160 = vrot.slane %v159, 1
    %v161 = vadd.f32 %v159, %v160
    %s162 = vtos %v161
    %s163 = sadd.f32 %s144, %s162
    %s164 = scalar_lea.smem [#allocation2], 2
    %165 = sst [smem:[%s164]] %s163
  $region25: #{combined_loss.1} parent=0 // pred_fallthru
    _
  // Predicated region
  $region26: #{combined_loss.1} parent=0 // pred_check
    _
  $region27: #{combined_loss.1} parent=0 // pred_check_branch
    %167 = sbr.rel (%p73) target = $region29
  $region28: #{combined_loss.1} parent=0 // pred_region
    %vm168 = vcmp.eq.s32.totalorder %v92, 0
    %s169 = sld [smem:[#allocation2]]
    %vm170 = vcmp.eq.s32.totalorder %v92, 1
    %s171 = sld [smem:[#allocation2 + $0x1]]
    %vm172 = vcmp.eq.s32.totalorder %v92, 2
    %s173 = sld [smem:[#allocation2 + $0x2]]
    %v174 = vstv %s173
    %v175 = vsel %vm172, %v174, 0.0
    %v176 = vstv %s171
    %v177 = vsel %vm170, %v176, %v175
    %v178 = vstv %s169
    %v179 = vsel %vm168, %v178, %v177
    %180 = vst [vmem:[%s4] sm:$0xff] %v179
  $region29: #{combined_loss.1} parent=0 // pred_fallthru
    _
  // Predicated region
  $region30: #{combined_loss.1} parent=0 // pred_check
    _
  $region31: #{combined_loss.1} parent=0 // pred_check_branch
    %182 = sbr.rel (0) target = $region33
  $region32: #{combined_loss.1} parent=0 // pred_region
    _
  $region33: #{combined_loss.1} parent=0 // pred_fallthru
    _
  // Predicated region
  $region34: #{combined_loss.1} parent=0 // pred_check
    _
  $region35: #{combined_loss.1} parent=0 // pred_check_branch
    %184 = sbr.rel (0) target = $region37
  $region36: #{combined_loss.1} parent=0 // pred_region
    _
  $region37: #{combined_loss.1} parent=0 // pred_fallthru
    _

</llo_original>
